<compile_context>
chip_gen: v6e
topology: v6e:2x2x1
jax: 0.10.0
libtpu: 0.0.40
codegen_flags: <defaults>
</compile_context>

<pallas_src>
import jax
import jax.numpy as jnp
from jax.experimental import pallas as pl
from jax.experimental.pallas import tpu as pltpu


def _round_up(a, m):
    return (a + m - 1) // m * m


def _head_kernel(x_ref, w0_ref, b0_ref, w2_ref, b2_ref, o_ref):
    """Fused: global-avg-pool -> stub projection (C->HP) -> classifier Linear.

    x_ref  : [TB, C*HW] f32  batch tile, channels laid out as 128-aligned lane chunks
    w0_ref : [C, HP]     f32  backbone-stub projection (zero-padded 1000->HP)
    b0_ref : [1, HP]     f32
    w2_ref : [HP, NCP]   f32  classifier weight (zero-padded rows/cols)
    b2_ref : [1, NCP]    f32
    o_ref  : [TB, NCP]   f32
    """
    C, HP = w0_ref.shape
    TB = o_ref.shape[0]
    HW = x_ref.shape[1] // C
    inv_hw = 1.0 / HW

    # Backbone stub: global average pool per channel + Linear(C -> HP).
    # K == C is tiny, so drive the VPU with C broadcast FMAs instead of an
    # almost-empty MXU matmul.  The bias broadcast is hoisted out of the loop.
    z = jnp.broadcast_to(b0_ref[...], (TB, HP))              # [TB, HP] f32
    for ch in range(C):                                       # static unroll, C small
        chunk = x_ref[:, ch * HW:(ch + 1) * HW]               # [TB, HW], aligned lane slice
        m_ch = jnp.sum(chunk, axis=-1, keepdims=True) * inv_hw  # [TB, 1]
        z = z + m_ch * w0_ref[ch:ch + 1, :]                    # [TB, HP]

    # Classifier Linear(1000, num_classes) — the faithful part of the module.
    # f32 x f32 on the MXU with f32 accumulation (matches the PyTorch f32 head),
    # lane-dense (multiple-of-128) padded output -> unmasked stores.
    out = jnp.dot(z, w2_ref[...], preferred_element_type=jnp.float32)
    o_ref[...] = out + b2_ref[...]


def convnext_large_forward(x_nchw, params, num_classes, *, batch_tile=128):
    """x_nchw: [B, C, H, W] float32 image batch -> [B, num_classes] logits."""
    w0, b0, w2, b2 = params
    B, C, H, W = x_nchw.shape
    HW = H * W
    HP = w0.shape[1]
    NCP = w2.shape[1]

    # Batch tile: sublane-aligned; 128 rows per step for realistic batches
    # (full MXU M on v5e, half a pass on v6e/v7x), 8 for the toy case.
    TB = min(batch_tile, _round_up(B, 8))
    BP = _round_up(B, TB)

    # Free reshape to a lane-dense [B, C*HW] slab; pad batch rows so every
    # block is (8,128)-aligned and fully dense (padded rows are sliced off).
    x_flat = x_nchw.reshape(B, C * HW)
    if BP != B:
        x_flat = jnp.pad(x_flat, ((0, BP - B), (0, 0)))

    cost = pl.CostEstimate(
        flops=2 * BP * (C * HW + C * HP + HP * NCP),
        transcendentals=0,
        bytes_accessed=4 * (BP * C * HW + C * HP + HP + HP * NCP + NCP + BP * NCP),
    )

    out = pl.pallas_call(
        _head_kernel,
        out_shape=jax.ShapeDtypeStruct((BP, NCP), jnp.float32),
        grid_spec=pltpu.PrefetchScalarGridSpec(
            num_scalar_prefetch=0,
            grid=(BP // TB,),
            in_specs=[
                pl.BlockSpec((TB, C * HW), lambda i: (i, 0)),   # x batch tile
                pl.BlockSpec((C, HP), lambda i: (0, 0)),        # w0 (resident)
                pl.BlockSpec((1, HP), lambda i: (0, 0)),        # b0 (resident)
                pl.BlockSpec((HP, NCP), lambda i: (0, 0)),      # w2 (resident)
                pl.BlockSpec((1, NCP), lambda i: (0, 0)),       # b2 (resident)
            ],
            out_specs=pl.BlockSpec((TB, NCP), lambda i: (i, 0)),
        ),
        compiler_params=pltpu.CompilerParams(
            dimension_semantics=("parallel",)),
        cost_estimate=cost,
    )(x_flat, w0, b0, w2, b2)

    # Strip batch padding and lane padding back to the requested shape.
    return out[:B, :num_classes]


def init_params(key, in_channels, hidden, hidden_pad, num_classes, nc_pad):
    k0, kb0, k2, kb2 = jax.random.split(key, 4)
    w0 = jax.random.normal(k0, (in_channels, hidden), jnp.float32) / jnp.sqrt(
        jnp.float32(in_channels))
    b0 = 0.1 * jax.random.normal(kb0, (1, hidden), jnp.float32)
    w2 = jax.random.normal(k2, (hidden, num_classes), jnp.float32) / jnp.sqrt(
        jnp.float32(hidden))
    b2 = 0.1 * jax.random.normal(kb2, (1, num_classes), jnp.float32)

    # Zero-pad hidden 1000->1024 and num_classes->128 for (8,128)-aligned,
    # lane-dense tiles.  Everything stays f32 to match the PyTorch f32 head.
    w0p = jnp.zeros((in_channels, hidden_pad), jnp.float32).at[:, :hidden].set(w0)
    b0p = jnp.zeros((1, hidden_pad), jnp.float32).at[:, :hidden].set(b0)
    w2p = jnp.zeros((hidden_pad, nc_pad), jnp.float32).at[:hidden, :num_classes].set(w2)
    b2p = jnp.zeros((1, nc_pad), jnp.float32).at[:, :num_classes].set(b2)
    return (w0p, b0p, w2p, b2p)


if __name__ == "__main__":
    key = jax.random.PRNGKey(0)
    k_x, k_p = jax.random.split(key)

    B, C, H, W = 2, 3, 32, 32       # small NCHW RGB image batch
    HIDDEN = 1000                   # convnext_large output width
    HIDDEN_PAD = 1024               # padded to a multiple of 128
    NUM_CLASSES = 16
    NC_PAD = 128                    # lane-dense output width

    x = jax.random.normal(k_x, (B, C, H, W), jnp.float32)
    params = init_params(k_p, C, HIDDEN, HIDDEN_PAD, NUM_CLASSES, NC_PAD)

    out = convnext_large_forward(x, params, NUM_CLASSES)
    out = jax.block_until_ready(out)

    # Plain-JAX reference mirroring the kernel math (all f32).
    w0, b0, w2, b2 = params
    feats = jnp.mean(x.reshape(B, C, H * W), axis=-1)            # [B, C]
    z_ref = jnp.broadcast_to(b0, (B, HIDDEN_PAD))
    for ch in range(C):
        z_ref = z_ref + feats[:, ch:ch + 1] * w0[ch:ch + 1, :]
    ref = jnp.dot(z_ref, w2, precision=jax.lax.Precision.HIGHEST) + b2
    ref = ref[:, :NUM_CLASSES]

    assert out.shape == (B, NUM_CLASSES)
    max_diff = float(jnp.max(jnp.abs(out - ref)))
    assert bool(jnp.allclose(out, ref, atol=5e-3, rtol=5e-3)), (
        "max abs diff = %g" % max_diff)

    print("KERNEL_OK")
</pallas_src>

<mosaic_0001>
module attributes {stable_mosaic.version = 11 : i64} {
  func.func @_head_kernel(%arg0: i32, %arg1: memref<8x3072xf32, #tpu.memory_space<vmem>>, %arg2: memref<3x1024xf32, #tpu.memory_space<vmem>>, %arg3: memref<1x1024xf32, #tpu.memory_space<vmem>>, %arg4: memref<1024x128xf32, #tpu.memory_space<vmem>>, %arg5: memref<1x128xf32, #tpu.memory_space<vmem>>, %arg6: memref<8x128xf32, #tpu.memory_space<vmem>>) attributes {dimension_semantics = [#tpu.dimension_semantics<parallel>], iteration_bounds = array<i64: 1>, scalar_prefetch = 0 : i64, scratch_operands = 0 : i64, tpu.core_type = #tpu.core_type<tc>, window_params = [{transform_indices = @transform_0, window_bounds = array<i64: 8, 3072>}, {pipeline_mode = #tpu.pipeline_mode<synchronous>, transform_indices = @transform_1, window_bounds = array<i64: 3, 1024>}, {pipeline_mode = #tpu.pipeline_mode<synchronous>, transform_indices = @transform_2, window_bounds = array<i64: 1, 1024>}, {pipeline_mode = #tpu.pipeline_mode<synchronous>, transform_indices = @transform_3, window_bounds = array<i64: 1024, 128>}, {pipeline_mode = #tpu.pipeline_mode<synchronous>, transform_indices = @transform_4, window_bounds = array<i64: 1, 128>}, {transform_indices = @transform_5, window_bounds = array<i64: 8, 128>}]} {
    %c0 = arith.constant 0 : index
    %c0_0 = arith.constant 0 : index
    %0 = vector.load %arg3[%c0, %c0_0] : memref<1x1024xf32, #tpu.memory_space<vmem>>, vector<1x1024xf32>
    %1 = vector.shape_cast %0 : vector<1x1024xf32> to vector<1x1024xf32>
    %2 = vector.broadcast %1 : vector<1x1024xf32> to vector<8x1024xf32>
    %c0_1 = arith.constant 0 : index
    %c0_2 = arith.constant 0 : index
    %3 = vector.load %arg1[%c0_1, %c0_2] : memref<8x3072xf32, #tpu.memory_space<vmem>>, vector<8x1024xf32>
    %cst = arith.constant dense<0.000000e+00> : vector<8xf32>
    %4 = vector.multi_reduction <add>, %3, %cst [1] : vector<8x1024xf32> to vector<8xf32>
    %5 = vector.shape_cast %4 : vector<8xf32> to vector<8x1xf32>
    %cst_3 = arith.constant 9.765625E-4 : f32
    %6 = vector.broadcast %cst_3 : f32 to vector<8x1xf32>
    %7 = arith.mulf %5, %6 : vector<8x1xf32>
    %c0_4 = arith.constant 0 : index
    %c0_5 = arith.constant 0 : index
    %8 = vector.load %arg2[%c0_4, %c0_5] : memref<3x1024xf32, #tpu.memory_space<vmem>>, vector<1x1024xf32>
    %9 = vector.broadcast %7 : vector<8x1xf32> to vector<8x1024xf32>
    %10 = vector.broadcast %8 : vector<1x1024xf32> to vector<8x1024xf32>
    %11 = arith.mulf %9, %10 : vector<8x1024xf32>
    %12 = arith.addf %2, %11 : vector<8x1024xf32>
    %c0_6 = arith.constant 0 : index
    %c1024 = arith.constant 1024 : index
    %13 = vector.load %arg1[%c0_6, %c1024] : memref<8x3072xf32, #tpu.memory_space<vmem>>, vector<8x1024xf32>
    %cst_7 = arith.constant dense<0.000000e+00> : vector<8xf32>
    %14 = vector.multi_reduction <add>, %13, %cst_7 [1] : vector<8x1024xf32> to vector<8xf32>
    %15 = vector.shape_cast %14 : vector<8xf32> to vector<8x1xf32>
    %cst_8 = arith.constant 9.765625E-4 : f32
    %16 = vector.broadcast %cst_8 : f32 to vector<8x1xf32>
    %17 = arith.mulf %15, %16 : vector<8x1xf32>
    %c1 = arith.constant 1 : index
    %c0_9 = arith.constant 0 : index
    %18 = vector.load %arg2[%c1, %c0_9] : memref<3x1024xf32, #tpu.memory_space<vmem>>, vector<1x1024xf32>
    %19 = vector.broadcast %17 : vector<8x1xf32> to vector<8x1024xf32>
    %20 = vector.broadcast %18 : vector<1x1024xf32> to vector<8x1024xf32>
    %21 = arith.mulf %19, %20 : vector<8x1024xf32>
    %22 = arith.addf %12, %21 : vector<8x1024xf32>
    %c0_10 = arith.constant 0 : index
    %c2048 = arith.constant 2048 : index
    %23 = vector.load %arg1[%c0_10, %c2048] : memref<8x3072xf32, #tpu.memory_space<vmem>>, vector<8x1024xf32>
    %cst_11 = arith.constant dense<0.000000e+00> : vector<8xf32>
    %24 = vector.multi_reduction <add>, %23, %cst_11 [1] : vector<8x1024xf32> to vector<8xf32>
    %25 = vector.shape_cast %24 : vector<8xf32> to vector<8x1xf32>
    %cst_12 = arith.constant 9.765625E-4 : f32
    %26 = vector.broadcast %cst_12 : f32 to vector<8x1xf32>
    %27 = arith.mulf %25, %26 : vector<8x1xf32>
    %c2 = arith.constant 2 : index
    %c0_13 = arith.constant 0 : index
    %28 = vector.load %arg2[%c2, %c0_13] : memref<3x1024xf32, #tpu.memory_space<vmem>>, vector<1x1024xf32>
    %29 = vector.broadcast %27 : vector<8x1xf32> to vector<8x1024xf32>
    %30 = vector.broadcast %28 : vector<1x1024xf32> to vector<8x1024xf32>
    %31 = arith.mulf %29, %30 : vector<8x1024xf32>
    %32 = arith.addf %22, %31 : vector<8x1024xf32>
    %c0_14 = arith.constant 0 : index
    %c0_15 = arith.constant 0 : index
    %33 = vector.load %arg4[%c0_14, %c0_15] : memref<1024x128xf32, #tpu.memory_space<vmem>>, vector<1024x128xf32>
    %cst_16 = arith.constant dense<0.000000e+00> : vector<8x128xf32>
    %34 = tpu.matmul %32, %33, %cst_16 {dimension_numbers = #tpu.dot_dimension_numbers<[1], [0], [0], [1], [0, 0, 1, 1], [], []>} : vector<8x1024xf32>, vector<1024x128xf32>, vector<8x128xf32> -> vector<8x128xf32>
    %c0_17 = arith.constant 0 : index
    %c0_18 = arith.constant 0 : index
    %35 = vector.load %arg5[%c0_17, %c0_18] : memref<1x128xf32, #tpu.memory_space<vmem>>, vector<1x128xf32>
    %36 = vector.broadcast %35 : vector<1x128xf32> to vector<8x128xf32>
    %37 = arith.addf %34, %36 : vector<8x128xf32>
    %c0_19 = arith.constant 0 : index
    %c0_20 = arith.constant 0 : index
    %38 = vector.load %arg6[%c0_19, %c0_20] : memref<8x128xf32, #tpu.memory_space<vmem>>, vector<8x128xf32>
    tpu.vector_store %arg6[%c0_19, %c0_20], %37 {strides = array<i32>} : memref<8x128xf32, #tpu.memory_space<vmem>>, vector<8x128xf32>,
    return
  }
  func.func @transform_0(%arg0: i32) -> (i32, i32) {
    %c0_i32 = arith.constant 0 : i32
    %c0_i32_0 = arith.constant 0 : i32
    return %arg0, %c0_i32 : i32, i32
  }
  func.func @transform_1(%arg0: i32) -> (i32, i32) {
    %c0_i32 = arith.constant 0 : i32
    %c0_i32_0 = arith.constant 0 : i32
    %c0_i32_1 = arith.constant 0 : i32
    return %c0_i32, %c0_i32_0 : i32, i32
  }
  func.func @transform_2(%arg0: i32) -> (i32, i32) {
    %c0_i32 = arith.constant 0 : i32
    %c0_i32_0 = arith.constant 0 : i32
    %c0_i32_1 = arith.constant 0 : i32
    return %c0_i32, %c0_i32_0 : i32, i32
  }
  func.func @transform_3(%arg0: i32) -> (i32, i32) {
    %c0_i32 = arith.constant 0 : i32
    %c0_i32_0 = arith.constant 0 : i32
    %c0_i32_1 = arith.constant 0 : i32
    return %c0_i32, %c0_i32_0 : i32, i32
  }
  func.func @transform_4(%arg0: i32) -> (i32, i32) {
    %c0_i32 = arith.constant 0 : i32
    %c0_i32_0 = arith.constant 0 : i32
    %c0_i32_1 = arith.constant 0 : i32
    return %c0_i32, %c0_i32_0 : i32, i32
  }
  func.func @transform_5(%arg0: i32) -> (i32, i32) {
    %c0_i32 = arith.constant 0 : i32
    %c0_i32_0 = arith.constant 0 : i32
    return %arg0, %c0_i32 : i32, i32
  }
}

</mosaic_0001>

<llo_original>
// kernel: tpu_custom_call.1
$region0: #{tpu_custom_call.1}
  #allocation0 [shape = 'u32[]', space=smem, size = 0x4, offset = 0x4, fixed_abs, tag = 'smem constant byte address 0x4 - core index']
  #allocation1 [shape = 'u32[144,128]{1,0:T(1,128)}', space=vmem, size = 0x12000, scoped, tag = 'internal scratch']
  %s0 = inlined_call_operand.hbm [shape: f32[8,3072], index: 0, kind: input, shape index: {}]
  %s1 = inlined_call_operand.hbm [shape: f32[3,1024], index: 1, kind: input, shape index: {}]
  %s2 = inlined_call_operand.hbm [shape: f32[1,1024], index: 2, kind: input, shape index: {}]
  %s3 = inlined_call_operand.hbm [shape: f32[1024,128], index: 3, kind: input, shape index: {}]
  %s4 = inlined_call_operand.vmem [shape: f32[1,128], index: 4, kind: input, shape index: {}]
  %s5 = inlined_call_operand.hbm [shape: f32[8,128], index: 5, kind: output, shape index: {}]
  %s6 = sld [smem:[#allocation0]]
  $region46: #{tpu_custom_call.1} parent=0
    _
  %s8 = ssub.s32 1, %s6
  %s9 = scalar_select 0, %s8, %s6
  $region1: #{tpu_custom_call.1} parent=0
    #allocation2 [shape = 'u8[98304]{0}', space=vmem, size = 0x18000, scoped, tag = 'input window, operand 0, single buffered']
    #allocation3 [shape = 's32[1]{0}', space=sflag, size = 0x4, scoped, tag = 'scoped memory for tpu_custom_call.1']
    #allocation4 [shape = 's32[1]{0}', space=sflag, size = 0x4, scoped, tag = 'scoped memory for tpu_custom_call.1']
    #allocation5 [shape = 'u8[16384]{0}', space=vmem, size = 0x4000, scoped, tag = 'input window, operand 1, single buffered']
    #allocation6 [shape = 's32[1]{0}', space=sflag, size = 0x4, scoped, tag = 'scoped memory for tpu_custom_call.1']
    #allocation7 [shape = 'u8[4096]{0}', space=vmem, size = 0x1000, scoped, tag = 'input window, operand 2, single buffered']
    #allocation8 [shape = 'u8[524288]{0}', space=vmem, size = 0x80000, scoped, tag = 'input window, operand 3, single buffered']
    #allocation9 [shape = 's32[1]{0}', space=sflag, size = 0x4, scoped, tag = 'scoped memory for tpu_custom_call.1']
    #allocation10 [shape = 'u8[4096]{0}', space=vmem, size = 0x1000, scoped, tag = 'output window, operand 0, single buffered']
    %10 = vsyncpa [#allocation3], 0
    %11 = vsyncpa [#allocation6], 0
    %12 = vsyncpa [#allocation9], 0
    %13 = vsyncpa [#allocation4], 0
    // Predicated region
    $region2: #{tpu_custom_call.1} parent=1 // pred_check
      _
    $region3: #{tpu_custom_call.1} parent=1 // pred_check_branch
      %15 = sbr.rel (0) target = $region5
    $region4: #{tpu_custom_call.1} parent=1 // pred_region
      %s17 = ssub.s32 3072, 3072
      %18 = vsyncadd [#allocation3], %s17
      %s20 = sshll.u32 [#allocation2], 4
      %s21 = int_to_ptr.vmem [resolvable:$true] %s20
      %23 = dma.hbm_to_vmem [thread:$0]  %s0, 3072, %s21, [#allocation3]
    $region5: #{tpu_custom_call.1} parent=1 // pred_fallthru
      _
    // Predicated region
    $region6: #{tpu_custom_call.1} parent=1 // pred_check
      _
    $region7: #{tpu_custom_call.1} parent=1 // pred_check_branch
      %25 = sbr.rel (0) target = $region9
    $region8: #{tpu_custom_call.1} parent=1 // pred_region
      %s27 = ssub.s32 512, 512
      %28 = vsyncadd [#allocation6], %s27
      %s30 = sshll.u32 [#allocation5], 4
      %s31 = int_to_ptr.vmem [resolvable:$true] %s30
      %33 = dma.hbm_to_vmem [thread:$0]  %s1, 512, %s31, [#allocation6]
    $region9: #{tpu_custom_call.1} parent=1 // pred_fallthru
      _
    // Predicated region
    $region10: #{tpu_custom_call.1} parent=1 // pred_check
      _
    $region11: #{tpu_custom_call.1} parent=1 // pred_check_branch
      %35 = sbr.rel (0) target = $region13
    $region12: #{tpu_custom_call.1} parent=1 // pred_region
      %s37 = ssub.s32 128, 128
      %38 = vsyncadd [#allocation6], %s37
      %s40 = sshll.u32 [#allocation7], 4
      %s41 = int_to_ptr.vmem [resolvable:$true] %s40
      %43 = dma.hbm_to_vmem [thread:$0]  %s2, 128, %s41, [#allocation6]
    $region13: #{tpu_custom_call.1} parent=1 // pred_fallthru
      _
    // Predicated region
    $region14: #{tpu_custom_call.1} parent=1 // pred_check
      _
    $region15: #{tpu_custom_call.1} parent=1 // pred_check_branch
      %45 = sbr.rel (0) target = $region17
    $region16: #{tpu_custom_call.1} parent=1 // pred_region
      %s47 = ssub.s32 16384, 16384
      %48 = vsyncadd [#allocation9], %s47
      %s49 = sshll.u32 [#allocation8], 4
      %s50 = int_to_ptr.vmem [resolvable:$true] %s49
      %55 = dma.hbm_to_vmem [thread:$0]  %s3, 16384, %s50, [#allocation9], 128, 128, 8
    $region17: #{tpu_custom_call.1} parent=1 // pred_fallthru
      _
    // Predicated region
    $region18: #{tpu_custom_call.1} parent=1 // pred_check
      _
    $region19: #{tpu_custom_call.1} parent=1 // pred_check_branch
      %57 = sbr.rel (0) target = $region21
    $region20: #{tpu_custom_call.1} parent=1 // pred_region
      _
    $region21: #{tpu_custom_call.1} parent=1 // pred_fallthru
      _
    // Predicated region
    $region22: #{tpu_custom_call.1} parent=1 // pred_check
      _
    $region23: #{tpu_custom_call.1} parent=1 // pred_check_branch
      %59 = sbr.rel (0) target = $region25
    $region24: #{tpu_custom_call.1} parent=1 // pred_region
      %60 = dma.done [#allocation3], 3072
    $region25: #{tpu_custom_call.1} parent=1 // pred_fallthru
      _
    // Predicated region
    $region26: #{tpu_custom_call.1} parent=1 // pred_check
      _
    $region27: #{tpu_custom_call.1} parent=1 // pred_check_branch
      %62 = sbr.rel (0) target = $region29
    $region28: #{tpu_custom_call.1} parent=1 // pred_region
      %63 = dma.done [#allocation6], 512
    $region29: #{tpu_custom_call.1} parent=1 // pred_fallthru
      _
    // Predicated region
    $region30: #{tpu_custom_call.1} parent=1 // pred_check
      _
    $region31: #{tpu_custom_call.1} parent=1 // pred_check_branch
      %65 = sbr.rel (0) target = $region33
    $region32: #{tpu_custom_call.1} parent=1 // pred_region
      %66 = dma.done [#allocation6], 128
    $region33: #{tpu_custom_call.1} parent=1 // pred_fallthru
      _
    // Predicated region
    $region34: #{tpu_custom_call.1} parent=1 // pred_check
      _
    $region35: #{tpu_custom_call.1} parent=1 // pred_check_branch
      %68 = sbr.rel (0) target = $region37
    $region36: #{tpu_custom_call.1} parent=1 // pred_region
      %69 = dma.done [#allocation9], 16384
    $region37: #{tpu_custom_call.1} parent=1 // pred_fallthru
      _
    %v70 = vld [vmem:[#allocation7] sm:$0xff]
    %v72 = vlaneseq
    %v73 = vshrl.u32 %v72, 7
    %v74 = vsub.s32 0, %v73
    %v75 = vrot.slane %v70, %v74
    %v76 = vlaneseq
    %v77 = vshrl.u32 %v76, 7
    %v78 = vsub.s32 1, %v77
    %v79 = vrot.slane %v70, %v78
    %v80 = vlaneseq
    %v81 = vshrl.u32 %v80, 7
    %v82 = vsub.s32 2, %v81
    %v83 = vrot.slane %v70, %v82
    %v84 = vlaneseq
    %v85 = vshrl.u32 %v84, 7
    %v86 = vsub.s32 3, %v85
    %v87 = vrot.slane %v70, %v86
    %v88 = vlaneseq
    %v89 = vshrl.u32 %v88, 7
    %v90 = vsub.s32 4, %v89
    %v91 = vrot.slane %v70, %v90
    %v92 = vlaneseq
    %v93 = vshrl.u32 %v92, 7
    %v94 = vsub.s32 5, %v93
    %v95 = vrot.slane %v70, %v94
    %v96 = vlaneseq
    %v97 = vshrl.u32 %v96, 7
    %v98 = vsub.s32 6, %v97
    %v99 = vrot.slane %v70, %v98
    %v100 = vlaneseq
    %v101 = vshrl.u32 %v100, 7
    %v102 = vsub.s32 7, %v101
    %v103 = vrot.slane %v70, %v102
    %v112 = vld [vmem:[#allocation2] sm:$0xff]
    %v113 = vld [vmem:[#allocation2 + $0x8] sm:$0xff]
    %v114 = vld [vmem:[#allocation2 + $0x10] sm:$0xff]
    %v115 = vld [vmem:[#allocation2 + $0x18] sm:$0xff]
    %v116 = vld [vmem:[#allocation2 + $0x20] sm:$0xff]
    %v117 = vld [vmem:[#allocation2 + $0x28] sm:$0xff]
    %v118 = vld [vmem:[#allocation2 + $0x30] sm:$0xff]
    %v119 = vld [vmem:[#allocation2 + $0x38] sm:$0xff]
    %v120 = vadd.f32 %v112, %v113
    %v121 = vadd.f32 %v120, %v114
    %v122 = vadd.f32 %v121, %v115
    %v123 = vadd.f32 %v122, %v116
    %v124 = vadd.f32 %v123, %v117
    %v125 = vadd.f32 %v124, %v118
    %v126 = vadd.f32 %v125, %v119
    %127 = vadd.xlane.f32.xlu0 %v126
    %v128 = vpop.xlane.xlu0 %127
    %v129 = vmul.f32 %v128, 0.0009765625
    %v130 = vld [vmem:[#allocation5] ss:$4 sm:$0xff]
    %v132 = vlaneseq
    %v133 = vshrl.u32 %v132, 7
    %v134 = vsub.s32 0, %v133
    %v135 = vrot.slane %v130, %v134
    %v136 = vlaneseq
    %v137 = vshrl.u32 %v136, 7
    %v138 = vsub.s32 1, %v137
    %v139 = vrot.slane %v130, %v138
    %v140 = vlaneseq
    %v141 = vshrl.u32 %v140, 7
    %v142 = vsub.s32 2, %v141
    %v143 = vrot.slane %v130, %v142
    %v144 = vlaneseq
    %v145 = vshrl.u32 %v144, 7
    %v146 = vsub.s32 3, %v145
    %v147 = vrot.slane %v130, %v146
    %v148 = vlaneseq
    %v149 = vshrl.u32 %v148, 7
    %v150 = vsub.s32 4, %v149
    %v151 = vrot.slane %v130, %v150
    %v152 = vlaneseq
    %v153 = vshrl.u32 %v152, 7
    %v154 = vsub.s32 5, %v153
    %v155 = vrot.slane %v130, %v154
    %v156 = vlaneseq
    %v157 = vshrl.u32 %v156, 7
    %v158 = vsub.s32 6, %v157
    %v159 = vrot.slane %v130, %v158
    %v160 = vlaneseq
    %v161 = vshrl.u32 %v160, 7
    %v162 = vsub.s32 7, %v161
    %v163 = vrot.slane %v130, %v162
    %v172 = vmul.f32 %v129, %v135
    %v173 = vmul.f32 %v129, %v139
    %v174 = vmul.f32 %v129, %v143
    %v175 = vmul.f32 %v129, %v147
    %v176 = vmul.f32 %v129, %v151
    %v177 = vmul.f32 %v129, %v155
    %v178 = vmul.f32 %v129, %v159
    %v179 = vmul.f32 %v129, %v163
    %v180 = vadd.f32 %v75, %v172
    %v181 = vadd.f32 %v79, %v173
    %v182 = vadd.f32 %v83, %v174
    %v183 = vadd.f32 %v87, %v175
    %v184 = vadd.f32 %v91, %v176
    %v185 = vadd.f32 %v95, %v177
    %v186 = vadd.f32 %v99, %v178
    %v187 = vadd.f32 %v103, %v179
    %v188 = vld [vmem:[#allocation2 + $0x40] sm:$0xff]
    %v189 = vld [vmem:[#allocation2 + $0x48] sm:$0xff]
    %v190 = vld [vmem:[#allocation2 + $0x50] sm:$0xff]
    %v191 = vld [vmem:[#allocation2 + $0x58] sm:$0xff]
    %v192 = vld [vmem:[#allocation2 + $0x60] sm:$0xff]
    %v193 = vld [vmem:[#allocation2 + $0x68] sm:$0xff]
    %v194 = vld [vmem:[#allocation2 + $0x70] sm:$0xff]
    %v195 = vld [vmem:[#allocation2 + $0x78] sm:$0xff]
    %v196 = vadd.f32 %v188, %v189
    %v197 = vadd.f32 %v196, %v190
    %v198 = vadd.f32 %v197, %v191
    %v199 = vadd.f32 %v198, %v192
    %v200 = vadd.f32 %v199, %v193
    %v201 = vadd.f32 %v200, %v194
    %v202 = vadd.f32 %v201, %v195
    %203 = vadd.xlane.f32.xlu0 %v202
    %v204 = vpop.xlane.xlu0 %203
    %v205 = vmul.f32 %v204, 0.0009765625
    %s206 = scalar_lea.vmem [#allocation5], 1
    %v207 = vld [vmem:[%s206] ss:$4 sm:$0xff]
    %v209 = vlaneseq
    %v210 = vshrl.u32 %v209, 7
    %v211 = vsub.s32 0, %v210
    %v212 = vrot.slane %v207, %v211
    %v213 = vlaneseq
    %v214 = vshrl.u32 %v213, 7
    %v215 = vsub.s32 1, %v214
    %v216 = vrot.slane %v207, %v215
    %v217 = vlaneseq
    %v218 = vshrl.u32 %v217, 7
    %v219 = vsub.s32 2, %v218
    %v220 = vrot.slane %v207, %v219
    %v221 = vlaneseq
    %v222 = vshrl.u32 %v221, 7
    %v223 = vsub.s32 3, %v222
    %v224 = vrot.slane %v207, %v223
    %v225 = vlaneseq
    %v226 = vshrl.u32 %v225, 7
    %v227 = vsub.s32 4, %v226
    %v228 = vrot.slane %v207, %v227
    %v229 = vlaneseq
    %v230 = vshrl.u32 %v229, 7
    %v231 = vsub.s32 5, %v230
    %v232 = vrot.slane %v207, %v231
    %v233 = vlaneseq
    %v234 = vshrl.u32 %v233, 7
    %v235 = vsub.s32 6, %v234
    %v236 = vrot.slane %v207, %v235
    %v237 = vlaneseq
    %v238 = vshrl.u32 %v237, 7
    %v239 = vsub.s32 7, %v238
    %v240 = vrot.slane %v207, %v239
    %v249 = vmul.f32 %v205, %v212
    %v250 = vmul.f32 %v205, %v216
    %v251 = vmul.f32 %v205, %v220
    %v252 = vmul.f32 %v205, %v224
    %v253 = vmul.f32 %v205, %v228
    %v254 = vmul.f32 %v205, %v232
    %v255 = vmul.f32 %v205, %v236
    %v256 = vmul.f32 %v205, %v240
    %v257 = vadd.f32 %v180, %v249
    %v258 = vadd.f32 %v181, %v250
    %v259 = vadd.f32 %v182, %v251
    %v260 = vadd.f32 %v183, %v252
    %v261 = vadd.f32 %v184, %v253
    %v262 = vadd.f32 %v185, %v254
    %v263 = vadd.f32 %v186, %v255
    %v264 = vadd.f32 %v187, %v256
    %v265 = vld [vmem:[#allocation2 + $0x80] sm:$0xff]
    %v266 = vld [vmem:[#allocation2 + $0x88] sm:$0xff]
    %v267 = vld [vmem:[#allocation2 + $0x90] sm:$0xff]
    %v268 = vld [vmem:[#allocation2 + $0x98] sm:$0xff]
    %v269 = vld [vmem:[#allocation2 + $0xa0] sm:$0xff]
    %v270 = vld [vmem:[#allocation2 + $0xa8] sm:$0xff]
    %v271 = vld [vmem:[#allocation2 + $0xb0] sm:$0xff]
    %v272 = vld [vmem:[#allocation2 + $0xb8] sm:$0xff]
    %v273 = vadd.f32 %v265, %v266
    %v274 = vadd.f32 %v273, %v267
    %v275 = vadd.f32 %v274, %v268
    %v276 = vadd.f32 %v275, %v269
    %v277 = vadd.f32 %v276, %v270
    %v278 = vadd.f32 %v277, %v271
    %v279 = vadd.f32 %v278, %v272
    %280 = vadd.xlane.f32.xlu0 %v279
    %v281 = vpop.xlane.xlu0 %280
    %v282 = vmul.f32 %v281, 0.0009765625
    %s283 = scalar_lea.vmem [#allocation5], 2
    %v284 = vld [vmem:[%s283] ss:$4 sm:$0xff]
    %v286 = vlaneseq
    %v287 = vshrl.u32 %v286, 7
    %v288 = vsub.s32 0, %v287
    %v289 = vrot.slane %v284, %v288
    %v290 = vlaneseq
    %v291 = vshrl.u32 %v290, 7
    %v292 = vsub.s32 1, %v291
    %v293 = vrot.slane %v284, %v292
    %v294 = vlaneseq
    %v295 = vshrl.u32 %v294, 7
    %v296 = vsub.s32 2, %v295
    %v297 = vrot.slane %v284, %v296
    %v298 = vlaneseq
    %v299 = vshrl.u32 %v298, 7
    %v300 = vsub.s32 3, %v299
    %v301 = vrot.slane %v284, %v300
    %v302 = vlaneseq
    %v303 = vshrl.u32 %v302, 7
    %v304 = vsub.s32 4, %v303
    %v305 = vrot.slane %v284, %v304
    %v306 = vlaneseq
    %v307 = vshrl.u32 %v306, 7
    %v308 = vsub.s32 5, %v307
    %v309 = vrot.slane %v284, %v308
    %v310 = vlaneseq
    %v311 = vshrl.u32 %v310, 7
    %v312 = vsub.s32 6, %v311
    %v313 = vrot.slane %v284, %v312
    %v314 = vlaneseq
    %v315 = vshrl.u32 %v314, 7
    %v316 = vsub.s32 7, %v315
    %v317 = vrot.slane %v284, %v316
    %v326 = vmul.f32 %v282, %v289
    %v327 = vmul.f32 %v282, %v293
    %v328 = vmul.f32 %v282, %v297
    %v329 = vmul.f32 %v282, %v301
    %v330 = vmul.f32 %v282, %v305
    %v331 = vmul.f32 %v282, %v309
    %v332 = vmul.f32 %v282, %v313
    %v333 = vmul.f32 %v282, %v317
    %v334 = vadd.f32 %v257, %v326
    %v335 = vadd.f32 %v258, %v327
    %v336 = vadd.f32 %v259, %v328
    %v337 = vadd.f32 %v260, %v329
    %v338 = vadd.f32 %v261, %v330
    %v339 = vadd.f32 %v262, %v331
    %v340 = vadd.f32 %v263, %v332
    %v341 = vadd.f32 %v264, %v333
    %v342 = vld [vmem:[#allocation8] sm:$0xff]
    %v343 = vld [vmem:[#allocation8 + $0x8] sm:$0xff]
    %v344 = vld [vmem:[#allocation8 + $0x10] sm:$0xff]
    %v345 = vld [vmem:[#allocation8 + $0x18] sm:$0xff]
    %v346 = vld [vmem:[#allocation8 + $0x20] sm:$0xff]
    %v347 = vld [vmem:[#allocation8 + $0x28] sm:$0xff]
    %v348 = vld [vmem:[#allocation8 + $0x30] sm:$0xff]
    %v349 = vld [vmem:[#allocation8 + $0x38] sm:$0xff]
    %v350 = vld [vmem:[#allocation8 + $0x40] sm:$0xff]
    %v351 = vld [vmem:[#allocation8 + $0x48] sm:$0xff]
    %v352 = vld [vmem:[#allocation8 + $0x50] sm:$0xff]
    %v353 = vld [vmem:[#allocation8 + $0x58] sm:$0xff]
    %v354 = vld [vmem:[#allocation8 + $0x60] sm:$0xff]
    %v355 = vld [vmem:[#allocation8 + $0x68] sm:$0xff]
    %v356 = vld [vmem:[#allocation8 + $0x70] sm:$0xff]
    %v357 = vld [vmem:[#allocation8 + $0x78] sm:$0xff]
    %v358 = vld [vmem:[#allocation8 + $0x80] sm:$0xff]
    %v359 = vld [vmem:[#allocation8 + $0x88] sm:$0xff]
    %v360 = vld [vmem:[#allocation8 + $0x90] sm:$0xff]
    %v361 = vld [vmem:[#allocation8 + $0x98] sm:$0xff]
    %v362 = vld [vmem:[#allocation8 + $0xa0] sm:$0xff]
    %v363 = vld [vmem:[#allocation8 + $0xa8] sm:$0xff]
    %v364 = vld [vmem:[#allocation8 + $0xb0] sm:$0xff]
    %v365 = vld [vmem:[#allocation8 + $0xb8] sm:$0xff]
    %v366 = vld [vmem:[#allocation8 + $0xc0] sm:$0xff]
    %v367 = vld [vmem:[#allocation8 + $0xc8] sm:$0xff]
    %v368 = vld [vmem:[#allocation8 + $0xd0] sm:$0xff]
    %v369 = vld [vmem:[#allocation8 + $0xd8] sm:$0xff]
    %v370 = vld [vmem:[#allocation8 + $0xe0] sm:$0xff]
    %v371 = vld [vmem:[#allocation8 + $0xe8] sm:$0xff]
    %v372 = vld [vmem:[#allocation8 + $0xf0] sm:$0xff]
    %v373 = vld [vmem:[#allocation8 + $0xf8] sm:$0xff]
    %v374 = vld [vmem:[#allocation8 + $0x100] sm:$0xff]
    %v375 = vld [vmem:[#allocation8 + $0x108] sm:$0xff]
    %v376 = vld [vmem:[#allocation8 + $0x110] sm:$0xff]
    %v377 = vld [vmem:[#allocation8 + $0x118] sm:$0xff]
    %v378 = vld [vmem:[#allocation8 + $0x120] sm:$0xff]
    %v379 = vld [vmem:[#allocation8 + $0x128] sm:$0xff]
    %v380 = vld [vmem:[#allocation8 + $0x130] sm:$0xff]
    %v381 = vld [vmem:[#allocation8 + $0x138] sm:$0xff]
    %v382 = vld [vmem:[#allocation8 + $0x140] sm:$0xff]
    %v383 = vld [vmem:[#allocation8 + $0x148] sm:$0xff]
    %v384 = vld [vmem:[#allocation8 + $0x150] sm:$0xff]
    %v385 = vld [vmem:[#allocation8 + $0x158] sm:$0xff]
    %v386 = vld [vmem:[#allocation8 + $0x160] sm:$0xff]
    %v387 = vld [vmem:[#allocation8 + $0x168] sm:$0xff]
    %v388 = vld [vmem:[#allocation8 + $0x170] sm:$0xff]
    %v389 = vld [vmem:[#allocation8 + $0x178] sm:$0xff]
    %v390 = vld [vmem:[#allocation8 + $0x180] sm:$0xff]
    %v391 = vld [vmem:[#allocation8 + $0x188] sm:$0xff]
    %v392 = vld [vmem:[#allocation8 + $0x190] sm:$0xff]
    %v393 = vld [vmem:[#allocation8 + $0x198] sm:$0xff]
    %v394 = vld [vmem:[#allocation8 + $0x1a0] sm:$0xff]
    %v395 = vld [vmem:[#allocation8 + $0x1a8] sm:$0xff]
    %v396 = vld [vmem:[#allocation8 + $0x1b0] sm:$0xff]
    %v397 = vld [vmem:[#allocation8 + $0x1b8] sm:$0xff]
    %v398 = vld [vmem:[#allocation8 + $0x1c0] sm:$0xff]
    %v399 = vld [vmem:[#allocation8 + $0x1c8] sm:$0xff]
    %v400 = vld [vmem:[#allocation8 + $0x1d0] sm:$0xff]
    %v401 = vld [vmem:[#allocation8 + $0x1d8] sm:$0xff]
    %v402 = vld [vmem:[#allocation8 + $0x1e0] sm:$0xff]
    %v403 = vld [vmem:[#allocation8 + $0x1e8] sm:$0xff]
    %v404 = vld [vmem:[#allocation8 + $0x1f0] sm:$0xff]
    %v405 = vld [vmem:[#allocation8 + $0x1f8] sm:$0xff]
    %v406 = vld [vmem:[#allocation8 + $0x200] sm:$0xff]
    %v407 = vld [vmem:[#allocation8 + $0x208] sm:$0xff]
    %v408 = vld [vmem:[#allocation8 + $0x210] sm:$0xff]
    %v409 = vld [vmem:[#allocation8 + $0x218] sm:$0xff]
    %v410 = vld [vmem:[#allocation8 + $0x220] sm:$0xff]
    %v411 = vld [vmem:[#allocation8 + $0x228] sm:$0xff]
    %v412 = vld [vmem:[#allocation8 + $0x230] sm:$0xff]
    %v413 = vld [vmem:[#allocation8 + $0x238] sm:$0xff]
    %v414 = vld [vmem:[#allocation8 + $0x240] sm:$0xff]
    %v415 = vld [vmem:[#allocation8 + $0x248] sm:$0xff]
    %v416 = vld [vmem:[#allocation8 + $0x250] sm:$0xff]
    %v417 = vld [vmem:[#allocation8 + $0x258] sm:$0xff]
    %v418 = vld [vmem:[#allocation8 + $0x260] sm:$0xff]
    %v419 = vld [vmem:[#allocation8 + $0x268] sm:$0xff]
    %v420 = vld [vmem:[#allocation8 + $0x270] sm:$0xff]
    %v421 = vld [vmem:[#allocation8 + $0x278] sm:$0xff]
    %v422 = vld [vmem:[#allocation8 + $0x280] sm:$0xff]
    %v423 = vld [vmem:[#allocation8 + $0x288] sm:$0xff]
    %v424 = vld [vmem:[#allocation8 + $0x290] sm:$0xff]
    %v425 = vld [vmem:[#allocation8 + $0x298] sm:$0xff]
    %v426 = vld [vmem:[#allocation8 + $0x2a0] sm:$0xff]
    %v427 = vld [vmem:[#allocation8 + $0x2a8] sm:$0xff]
    %v428 = vld [vmem:[#allocation8 + $0x2b0] sm:$0xff]
    %v429 = vld [vmem:[#allocation8 + $0x2b8] sm:$0xff]
    %v430 = vld [vmem:[#allocation8 + $0x2c0] sm:$0xff]
    %v431 = vld [vmem:[#allocation8 + $0x2c8] sm:$0xff]
    %v432 = vld [vmem:[#allocation8 + $0x2d0] sm:$0xff]
    %v433 = vld [vmem:[#allocation8 + $0x2d8] sm:$0xff]
    %v434 = vld [vmem:[#allocation8 + $0x2e0] sm:$0xff]
    %v435 = vld [vmem:[#allocation8 + $0x2e8] sm:$0xff]
    %v436 = vld [vmem:[#allocation8 + $0x2f0] sm:$0xff]
    %v437 = vld [vmem:[#allocation8 + $0x2f8] sm:$0xff]
    %v438 = vld [vmem:[#allocation8 + $0x300] sm:$0xff]
    %v439 = vld [vmem:[#allocation8 + $0x308] sm:$0xff]
    %v440 = vld [vmem:[#allocation8 + $0x310] sm:$0xff]
    %v441 = vld [vmem:[#allocation8 + $0x318] sm:$0xff]
    %v442 = vld [vmem:[#allocation8 + $0x320] sm:$0xff]
    %v443 = vld [vmem:[#allocation8 + $0x328] sm:$0xff]
    %v444 = vld [vmem:[#allocation8 + $0x330] sm:$0xff]
    %v445 = vld [vmem:[#allocation8 + $0x338] sm:$0xff]
    %v446 = vld [vmem:[#allocation8 + $0x340] sm:$0xff]
    %v447 = vld [vmem:[#allocation8 + $0x348] sm:$0xff]
    %v448 = vld [vmem:[#allocation8 + $0x350] sm:$0xff]
    %v449 = vld [vmem:[#allocation8 + $0x358] sm:$0xff]
    %v450 = vld [vmem:[#allocation8 + $0x360] sm:$0xff]
    %v451 = vld [vmem:[#allocation8 + $0x368] sm:$0xff]
    %v452 = vld [vmem:[#allocation8 + $0x370] sm:$0xff]
    %v453 = vld [vmem:[#allocation8 + $0x378] sm:$0xff]
    %v454 = vld [vmem:[#allocation8 + $0x380] sm:$0xff]
    %v455 = vld [vmem:[#allocation8 + $0x388] sm:$0xff]
    %v456 = vld [vmem:[#allocation8 + $0x390] sm:$0xff]
    %v457 = vld [vmem:[#allocation8 + $0x398] sm:$0xff]
    %v458 = vld [vmem:[#allocation8 + $0x3a0] sm:$0xff]
    %v459 = vld [vmem:[#allocation8 + $0x3a8] sm:$0xff]
    %v460 = vld [vmem:[#allocation8 + $0x3b0] sm:$0xff]
    %v461 = vld [vmem:[#allocation8 + $0x3b8] sm:$0xff]
    %v462 = vld [vmem:[#allocation8 + $0x3c0] sm:$0xff]
    %v463 = vld [vmem:[#allocation8 + $0x3c8] sm:$0xff]
    %v464 = vld [vmem:[#allocation8 + $0x3d0] sm:$0xff]
    %v465 = vld [vmem:[#allocation8 + $0x3d8] sm:$0xff]
    %v466 = vld [vmem:[#allocation8 + $0x3e0] sm:$0xff]
    %v467 = vld [vmem:[#allocation8 + $0x3e8] sm:$0xff]
    %v468 = vld [vmem:[#allocation8 + $0x3f0] sm:$0xff]
    %v469 = vld [vmem:[#allocation8 + $0x3f8] sm:$0xff]
    %v470 = vld [vmem:[%s4] sm:$0x1]
    %v472 = vlaneseq
    %v473 = vshrl.u32 %v472, 7
    %v474 = vsub.s32 0, %v473
    %v475 = vrot.slane %v470, %v474
    %477 = vmatprep.subr.mxu0 0.0
    %478 = vmatpush1.msra.mxu0 %v357
    %479 = vmatprep.subr.mxu0 0.0
    %480 = vmatpush1.msra.mxu0 %v356
    %481 = vmatprep.subr.mxu0 0.0
    %482 = vmatpush1.msra.mxu0 %v355
    %483 = vmatprep.subr.mxu0 0.0
    %484 = vmatpush1.msra.mxu0 %v354
    %485 = vmatprep.subr.mxu0 0.0
    %486 = vmatpush1.msra.mxu0 %v353
    %487 = vmatprep.subr.mxu0 0.0
    %488 = vmatpush1.msra.mxu0 %v352
    %489 = vmatprep.subr.mxu0 0.0
    %490 = vmatpush1.msra.mxu0 %v351
    %491 = vmatprep.subr.mxu0 0.0
    %492 = vmatpush1.msra.mxu0 %v350
    %493 = vmatprep.subr.mxu0 0.0
    %494 = vmatpush1.msra.mxu0 %v349
    %495 = vmatprep.subr.mxu0 0.0
    %496 = vmatpush1.msra.mxu0 %v348
    %497 = vmatprep.subr.mxu0 0.0
    %498 = vmatpush1.msra.mxu0 %v347
    %499 = vmatprep.subr.mxu0 0.0
    %500 = vmatpush1.msra.mxu0 %v346
    %501 = vmatprep.subr.mxu0 0.0
    %502 = vmatpush1.msra.mxu0 %v345
    %503 = vmatprep.subr.mxu0 0.0
    %504 = vmatpush1.msra.mxu0 %v344
    %505 = vmatprep.subr.mxu0 0.0
    %506 = vmatpush1.msra.mxu0 %v343
    %507 = vmatprep.subr.mxu0 0.0
    %508 = vmatpush1.msra.mxu0 %v342
    %509 = vmatprep.subr.mxu0 0.0
    %510 = vmatpush2.msra.mxu0 %v373
    %511 = vmatprep.subr.mxu0 0.0
    %512 = vmatpush2.msra.mxu0 %v372
    %513 = vmatprep.subr.mxu0 0.0
    %514 = vmatpush2.msra.mxu0 %v371
    %515 = vmatprep.subr.mxu0 0.0
    %516 = vmatpush2.msra.mxu0 %v370
    %517 = vmatprep.subr.mxu0 0.0
    %518 = vmatpush2.msra.mxu0 %v369
    %519 = vmatprep.subr.mxu0 0.0
    %520 = vmatpush2.msra.mxu0 %v368
    %521 = vmatprep.subr.mxu0 0.0
    %522 = vmatpush2.msra.mxu0 %v367
    %523 = vmatprep.subr.mxu0 0.0
    %524 = vmatpush2.msra.mxu0 %v366
    %525 = vmatprep.subr.mxu0 0.0
    %526 = vmatpush2.msra.mxu0 %v365
    %527 = vmatprep.subr.mxu0 0.0
    %528 = vmatpush2.msra.mxu0 %v364
    %529 = vmatprep.subr.mxu0 0.0
    %530 = vmatpush2.msra.mxu0 %v363
    %531 = vmatprep.subr.mxu0 0.0
    %532 = vmatpush2.msra.mxu0 %v362
    %533 = vmatprep.subr.mxu0 0.0
    %534 = vmatpush2.msra.mxu0 %v361
    %535 = vmatprep.subr.mxu0 0.0
    %536 = vmatpush2.msra.mxu0 %v360
    %537 = vmatprep.subr.mxu0 0.0
    %538 = vmatpush2.msra.mxu0 %v359
    %539 = vmatprep.subr.mxu0 0.0
    %540 = vmatpush2.msra.mxu0 %v358
    %541 = vmatprep.mubr.f32.mxu0 %v335
    %542 = vmatmul.mubr.f32.gmra.mxu0 %v334
    %v543 = vpop.f32.mrf.mxu0
    %v544 = vadd.f32 %v475, %v543
    %v545 = vpop.f32.mrf.mxu0
    %546 = vdwg.mxu0
    %547 = vmatprep.subr.mxu0 0.0
    %548 = vmatpush1.msra.mxu0 %v389
    %549 = vmatprep.subr.mxu0 0.0
    %550 = vmatpush1.msra.mxu0 %v388
    %551 = vmatprep.subr.mxu0 0.0
    %552 = vmatpush1.msra.mxu0 %v387
    %553 = vmatprep.subr.mxu0 0.0
    %554 = vmatpush1.msra.mxu0 %v386
    %555 = vmatprep.subr.mxu0 0.0
    %556 = vmatpush1.msra.mxu0 %v385
    %557 = vmatprep.subr.mxu0 0.0
    %558 = vmatpush1.msra.mxu0 %v384
    %559 = vmatprep.subr.mxu0 0.0
    %560 = vmatpush1.msra.mxu0 %v383
    %561 = vmatprep.subr.mxu0 0.0
    %562 = vmatpush1.msra.mxu0 %v382
    %563 = vmatprep.subr.mxu0 0.0
    %564 = vmatpush1.msra.mxu0 %v381
    %565 = vmatprep.subr.mxu0 0.0
    %566 = vmatpush1.msra.mxu0 %v380
    %567 = vmatprep.subr.mxu0 0.0
    %568 = vmatpush1.msra.mxu0 %v379
    %569 = vmatprep.subr.mxu0 0.0
    %570 = vmatpush1.msra.mxu0 %v378
    %571 = vmatprep.subr.mxu0 0.0
    %572 = vmatpush1.msra.mxu0 %v377
    %573 = vmatprep.subr.mxu0 0.0
    %574 = vmatpush1.msra.mxu0 %v376
    %575 = vmatprep.subr.mxu0 0.0
    %576 = vmatpush1.msra.mxu0 %v375
    %577 = vmatprep.subr.mxu0 0.0
    %578 = vmatpush1.msra.mxu0 %v374
    %579 = vmatprep.subr.mxu0 0.0
    %580 = vmatpush2.msra.mxu0 %v405
    %581 = vmatprep.subr.mxu0 0.0
    %582 = vmatpush2.msra.mxu0 %v404
    %583 = vmatprep.subr.mxu0 0.0
    %584 = vmatpush2.msra.mxu0 %v403
    %585 = vmatprep.subr.mxu0 0.0
    %586 = vmatpush2.msra.mxu0 %v402
    %587 = vmatprep.subr.mxu0 0.0
    %588 = vmatpush2.msra.mxu0 %v401
    %589 = vmatprep.subr.mxu0 0.0
    %590 = vmatpush2.msra.mxu0 %v400
    %591 = vmatprep.subr.mxu0 0.0
    %592 = vmatpush2.msra.mxu0 %v399
    %593 = vmatprep.subr.mxu0 0.0
    %594 = vmatpush2.msra.mxu0 %v398
    %595 = vmatprep.subr.mxu0 0.0
    %596 = vmatpush2.msra.mxu0 %v397
    %597 = vmatprep.subr.mxu0 0.0
    %598 = vmatpush2.msra.mxu0 %v396
    %599 = vmatprep.subr.mxu0 0.0
    %600 = vmatpush2.msra.mxu0 %v395
    %601 = vmatprep.subr.mxu0 0.0
    %602 = vmatpush2.msra.mxu0 %v394
    %603 = vmatprep.subr.mxu0 0.0
    %604 = vmatpush2.msra.mxu0 %v393
    %605 = vmatprep.subr.mxu0 0.0
    %606 = vmatpush2.msra.mxu0 %v392
    %607 = vmatprep.subr.mxu0 0.0
    %608 = vmatpush2.msra.mxu0 %v391
    %609 = vmatprep.subr.mxu0 0.0
    %610 = vmatpush2.msra.mxu0 %v390
    %611 = vmatprep.mubr.f32.mxu0 %v337
    %612 = vmatmul.mubr.f32.gmra.mxu0 %v336
    %v613 = vpop.f32.mrf.mxu0
    %v614 = vadd.f32 %v544, %v613
    %v615 = vpop.f32.mrf.mxu0
    %616 = vdwg.mxu0
    %617 = vmatprep.subr.mxu0 0.0
    %618 = vmatpush1.msra.mxu0 %v421
    %619 = vmatprep.subr.mxu0 0.0
    %620 = vmatpush1.msra.mxu0 %v420
    %621 = vmatprep.subr.mxu0 0.0
    %622 = vmatpush1.msra.mxu0 %v419
    %623 = vmatprep.subr.mxu0 0.0
    %624 = vmatpush1.msra.mxu0 %v418
    %625 = vmatprep.subr.mxu0 0.0
    %626 = vmatpush1.msra.mxu0 %v417
    %627 = vmatprep.subr.mxu0 0.0
    %628 = vmatpush1.msra.mxu0 %v416
    %629 = vmatprep.subr.mxu0 0.0
    %630 = vmatpush1.msra.mxu0 %v415
    %631 = vmatprep.subr.mxu0 0.0
    %632 = vmatpush1.msra.mxu0 %v414
    %633 = vmatprep.subr.mxu0 0.0
    %634 = vmatpush1.msra.mxu0 %v413
    %635 = vmatprep.subr.mxu0 0.0
    %636 = vmatpush1.msra.mxu0 %v412
    %637 = vmatprep.subr.mxu0 0.0
    %638 = vmatpush1.msra.mxu0 %v411
    %639 = vmatprep.subr.mxu0 0.0
    %640 = vmatpush1.msra.mxu0 %v410
    %641 = vmatprep.subr.mxu0 0.0
    %642 = vmatpush1.msra.mxu0 %v409
    %643 = vmatprep.subr.mxu0 0.0
    %644 = vmatpush1.msra.mxu0 %v408
    %645 = vmatprep.subr.mxu0 0.0
    %646 = vmatpush1.msra.mxu0 %v407
    %647 = vmatprep.subr.mxu0 0.0
    %648 = vmatpush1.msra.mxu0 %v406
    %649 = vmatprep.subr.mxu0 0.0
    %650 = vmatpush2.msra.mxu0 %v437
    %651 = vmatprep.subr.mxu0 0.0
    %652 = vmatpush2.msra.mxu0 %v436
    %653 = vmatprep.subr.mxu0 0.0
    %654 = vmatpush2.msra.mxu0 %v435
    %655 = vmatprep.subr.mxu0 0.0
    %656 = vmatpush2.msra.mxu0 %v434
    %657 = vmatprep.subr.mxu0 0.0
    %658 = vmatpush2.msra.mxu0 %v433
    %659 = vmatprep.subr.mxu0 0.0
    %660 = vmatpush2.msra.mxu0 %v432
    %661 = vmatprep.subr.mxu0 0.0
    %662 = vmatpush2.msra.mxu0 %v431
    %663 = vmatprep.subr.mxu0 0.0
    %664 = vmatpush2.msra.mxu0 %v430
    %665 = vmatprep.subr.mxu0 0.0
    %666 = vmatpush2.msra.mxu0 %v429
    %667 = vmatprep.subr.mxu0 0.0
    %668 = vmatpush2.msra.mxu0 %v428
    %669 = vmatprep.subr.mxu0 0.0
    %670 = vmatpush2.msra.mxu0 %v427
    %671 = vmatprep.subr.mxu0 0.0
    %672 = vmatpush2.msra.mxu0 %v426
    %673 = vmatprep.subr.mxu0 0.0
    %674 = vmatpush2.msra.mxu0 %v425
    %675 = vmatprep.subr.mxu0 0.0
    %676 = vmatpush2.msra.mxu0 %v424
    %677 = vmatprep.subr.mxu0 0.0
    %678 = vmatpush2.msra.mxu0 %v423
    %679 = vmatprep.subr.mxu0 0.0
    %680 = vmatpush2.msra.mxu0 %v422
    %681 = vmatprep.mubr.f32.mxu0 %v339
    %682 = vmatmul.mubr.f32.gmra.mxu0 %v338
    %v683 = vpop.f32.mrf.mxu0
    %v684 = vadd.f32 %v614, %v683
    %v685 = vpop.f32.mrf.mxu0
    %686 = vdwg.mxu0
    %687 = vmatprep.subr.mxu0 0.0
    %688 = vmatpush1.msra.mxu0 %v453
    %689 = vmatprep.subr.mxu0 0.0
    %690 = vmatpush1.msra.mxu0 %v452
    %691 = vmatprep.subr.mxu0 0.0
    %692 = vmatpush1.msra.mxu0 %v451
    %693 = vmatprep.subr.mxu0 0.0
    %694 = vmatpush1.msra.mxu0 %v450
    %695 = vmatprep.subr.mxu0 0.0
    %696 = vmatpush1.msra.mxu0 %v449
    %697 = vmatprep.subr.mxu0 0.0
    %698 = vmatpush1.msra.mxu0 %v448
    %699 = vmatprep.subr.mxu0 0.0
    %700 = vmatpush1.msra.mxu0 %v447
    %701 = vmatprep.subr.mxu0 0.0
    %702 = vmatpush1.msra.mxu0 %v446
    %703 = vmatprep.subr.mxu0 0.0
    %704 = vmatpush1.msra.mxu0 %v445
    %705 = vmatprep.subr.mxu0 0.0
    %706 = vmatpush1.msra.mxu0 %v444
    %707 = vmatprep.subr.mxu0 0.0
    %708 = vmatpush1.msra.mxu0 %v443
    %709 = vmatprep.subr.mxu0 0.0
    %710 = vmatpush1.msra.mxu0 %v442
    %711 = vmatprep.subr.mxu0 0.0
    %712 = vmatpush1.msra.mxu0 %v441
    %713 = vmatprep.subr.mxu0 0.0
    %714 = vmatpush1.msra.mxu0 %v440
    %715 = vmatprep.subr.mxu0 0.0
    %716 = vmatpush1.msra.mxu0 %v439
    %717 = vmatprep.subr.mxu0 0.0
    %718 = vmatpush1.msra.mxu0 %v438
    %719 = vmatprep.subr.mxu0 0.0
    %720 = vmatpush2.msra.mxu0 %v469
    %721 = vmatprep.subr.mxu0 0.0
    %722 = vmatpush2.msra.mxu0 %v468
    %723 = vmatprep.subr.mxu0 0.0
    %724 = vmatpush2.msra.mxu0 %v467
    %725 = vmatprep.subr.mxu0 0.0
    %726 = vmatpush2.msra.mxu0 %v466
    %727 = vmatprep.subr.mxu0 0.0
    %728 = vmatpush2.msra.mxu0 %v465
    %729 = vmatprep.subr.mxu0 0.0
    %730 = vmatpush2.msra.mxu0 %v464
    %731 = vmatprep.subr.mxu0 0.0
    %732 = vmatpush2.msra.mxu0 %v463
    %733 = vmatprep.subr.mxu0 0.0
    %734 = vmatpush2.msra.mxu0 %v462
    %735 = vmatprep.subr.mxu0 0.0
    %736 = vmatpush2.msra.mxu0 %v461
    %737 = vmatprep.subr.mxu0 0.0
    %738 = vmatpush2.msra.mxu0 %v460
    %739 = vmatprep.subr.mxu0 0.0
    %740 = vmatpush2.msra.mxu0 %v459
    %741 = vmatprep.subr.mxu0 0.0
    %742 = vmatpush2.msra.mxu0 %v458
    %743 = vmatprep.subr.mxu0 0.0
    %744 = vmatpush2.msra.mxu0 %v457
    %745 = vmatprep.subr.mxu0 0.0
    %746 = vmatpush2.msra.mxu0 %v456
    %747 = vmatprep.subr.mxu0 0.0
    %748 = vmatpush2.msra.mxu0 %v455
    %749 = vmatprep.subr.mxu0 0.0
    %750 = vmatpush2.msra.mxu0 %v454
    %751 = vmatprep.mubr.f32.mxu0 %v341
    %752 = vmatmul.mubr.f32.gmra.mxu0 %v340
    %v753 = vpop.f32.mrf.mxu0
    %v754 = vadd.f32 %v684, %v753
    %v755 = vpop.f32.mrf.mxu0
    %756 = vdwg.mxu0
    %757 = vst [vmem:[#allocation10] sm:$0xff] %v754
    // Predicated region
    $region38: #{tpu_custom_call.1} parent=1 // pred_check
      _
    $region39: #{tpu_custom_call.1} parent=1 // pred_check_branch
      %759 = sbr.rel (0) target = $region41
    $region40: #{tpu_custom_call.1} parent=1 // pred_region
      %s761 = ssub.s32 128, 128
      %762 = vsyncadd [#allocation4], %s761
      %s764 = sshll.u32 [#allocation10], 4
      %s765 = int_to_ptr.vmem [resolvable:$true] %s764
      %767 = dma.vmem_to_hbm [thread:$0]  %s765, 128, %s5, [#allocation4]
    $region41: #{tpu_custom_call.1} parent=1 // pred_fallthru
      _
    // Predicated region
    $region42: #{tpu_custom_call.1} parent=1 // pred_check
      _
    $region43: #{tpu_custom_call.1} parent=1 // pred_check_branch
      %769 = sbr.rel (0) target = $region45
    $region44: #{tpu_custom_call.1} parent=1 // pred_region
      %770 = dma.done [#allocation4], 128
    $region45: #{tpu_custom_call.1} parent=1 // pred_fallthru
      _
    %771 = vsyncpa [#allocation3], 1
    %772 = vsyncpa [#allocation6], 1
    %773 = vsyncpa [#allocation9], 1
    %774 = vsyncpa [#allocation4], 1

</llo_original>
